<compile_context>
chip_gen: v6e
topology: v6e:2x2x1
jax: 0.10.0
libtpu: 0.0.40
codegen_flags: <defaults>
</compile_context>

<pallas_src>
import functools

import jax
import jax.numpy as jnp
from jax import lax
from jax.experimental import pallas as pl
from jax.experimental.pallas import tpu as pltpu


def _workload_counts_kernel(pos_ref, data_ref, out_ref, counts_ref, *,
                            num_points, tiles_per_core, tm):
    # pos_ref   : (K_pad, 2)   facility positions (rows >= num_fac are edge-pad)
    # data_ref  : (2, TM)      tile of data points, x in row 0, y in row 1
    # out_ref   : (K_pad, 1)   per-core partial counts (written on last i)
    # counts_ref: (K_pad, 1)   per-core counts accumulator (VMEM scratch)
    c = pl.program_id(0)                      # core-split axis ("parallel")
    i = pl.program_id(1)                      # M-tile axis ("arbitrary")
    t = c * tiles_per_core + i                # global tile index
    k_pad = pos_ref.shape[0]

    @pl.when(i == 0)
    def _init():
        counts_ref[...] = jnp.zeros_like(counts_ref)

    data_x = data_ref[0:1, :]                 # (1, TM)
    data_y = data_ref[1:2, :]                 # (1, TM)
    pos_x = pos_ref[:, 0:1]                   # (K_pad, 1)
    pos_y = pos_ref[:, 1:2]                   # (K_pad, 1)

    # Lane-dense pairwise squared distances: facilities on sublanes, points
    # on lanes.  Pure VPU work (depth-2 contraction; MXU would be wasted).
    dx = data_x - pos_x                       # (K_pad, TM)
    dy = data_y - pos_y                       # (K_pad, TM)
    dist2 = dx * dx + dy * dy                 # (K_pad, TM)

    # Nearest facility per point (argmin, first-index tie-break) via two
    # cheap sublane reductions.  Edge-padded facility rows duplicate the last
    # real facility and always lose the first-index tie-break.
    min_d = jnp.min(dist2, axis=0, keepdims=True)                    # (1, TM)
    row = lax.broadcasted_iota(jnp.int32, dist2.shape, 0)            # (K_pad, TM)
    idx = jnp.min(jnp.where(dist2 <= min_d, row, k_pad), axis=0,
                  keepdims=True)                                     # (1, TM)
    hit = row == idx                                                 # (K_pad, TM)

    # Only tiles containing padded lanes need the validity mask.
    is_tail = (t + 1) * tm > num_points

    @pl.when(jnp.logical_not(is_tail))
    def _steady():
        onehot = hit.astype(jnp.float32)                             # (K_pad, TM)
        counts_ref[...] += jnp.sum(onehot, axis=1, keepdims=True)    # lane fold (XLU)

    @pl.when(is_tail)
    def _tail():
        lane = t * tm + lax.broadcasted_iota(jnp.int32, (1, tm), 1)  # (1, TM)
        valid = (lane < num_points).astype(jnp.float32)              # (1, TM)
        onehot = jnp.where(hit, valid, 0.0)                          # (K_pad, TM)
        counts_ref[...] += jnp.sum(onehot, axis=1, keepdims=True)

    @pl.when(i == tiles_per_core - 1)
    def _writeback():
        out_ref[...] = counts_ref[...]


def _choose_tm(m, k_pad, *, cap=8192, vmem_budget=10 * 1024 * 1024):
    """Pick the M tile (lane) size from a conservative VMEM live-footprint model.

    ~6 materialized (K_pad, TM) f32 temps + double-buffered (2, TM) data,
    kept under ~10 MiB so it fits v5e's 16 MiB / v7x's 32 MiB scoped defaults.
    """
    per_lane_bytes = 6 * k_pad * 4 + 2 * 2 * 2 * 4
    tm = min(cap, vmem_budget // per_lane_bytes)
    tm = max(128, (tm // 128) * 128)
    m_pad = ((m + 127) // 128) * 128
    if m_pad < tm:                      # small problems -> single grid step
        tm = max(128, m_pad)
    return tm


def placement_objective1(x, data, input_dim, *, tm=None):
    """Pallas equivalent of PlacementObjective1.forward.

    x    : flat decision vector of shape (input_dim,)
    data : data points, shape (M, 2)
    Returns a (1, 1) float32 array (float64 in the torch original).
    """
    k = int(input_dim // 2)
    k_pad = max(8, ((k + 7) // 8) * 8)

    positions = jnp.reshape(jnp.asarray(x, jnp.float32), (k, 2))
    # Edge-pad facility rows: duplicates of the last facility always lose the
    # first-index tie-break, so they never receive any counts.
    positions = jnp.pad(positions, ((0, k_pad - k), (0, 0)), mode="edge")

    data = jnp.asarray(data, jnp.float32)
    m = int(data.shape[0])

    if tm is None:
        tm = _choose_tm(m, k_pad)
    assert tm % 128 == 0 and tm >= 128

    num_tiles = -(-m // tm)
    # Split M tiles across 2 TensorCores (v7x); harmless/sequential elsewhere.
    num_cores = 2 if num_tiles >= 2 else 1
    tiles_per_core = -(-num_tiles // num_cores)
    m_pad = num_cores * tiles_per_core * tm

    data_t = jnp.transpose(data)              # (2, M): point axis -> lanes
    if m_pad != m:
        data_t = jnp.pad(data_t, ((0, 0), (0, m_pad - m)))

    kernel = functools.partial(_workload_counts_kernel,
                               num_points=m,
                               tiles_per_core=tiles_per_core,
                               tm=tm)

    partial_counts = pl.pallas_call(
        kernel,
        out_shape=jax.ShapeDtypeStruct((num_cores, k_pad, 1), jnp.float32),
        grid_spec=pltpu.PrefetchScalarGridSpec(
            num_scalar_prefetch=0,
            grid=(num_cores, tiles_per_core),
            in_specs=[
                pl.BlockSpec((k_pad, 2), lambda c, i: (0, 0)),          # positions
                pl.BlockSpec((2, tm),
                             lambda c, i: (0, c * tiles_per_core + i)),  # data tile
            ],
            out_specs=pl.BlockSpec((None, k_pad, 1), lambda c, i: (c, 0, 0)),
            scratch_shapes=[pltpu.VMEM((k_pad, 1), jnp.float32)],
        ),
        compiler_params=pltpu.CompilerParams(
            dimension_semantics=("parallel", "arbitrary")),
    )(positions, data_t)

    # Tiny O(K) finalize in the wrapper (per review: keeps the megacore split
    # correct and the kernel's hot loop free of it).
    counts = jnp.sum(partial_counts[:, :k, 0], axis=0)      # (k,)
    mean = jnp.mean(counts)
    # Population variance (/K).  NOTE: torch.std default is unbiased (/(K-1));
    # the reconstructed metric uses population normalization.
    var = jnp.mean((counts - mean) ** 2)
    return jnp.sqrt(var).reshape(1, 1)


def _reference(x, data, input_dim):
    """Plain-JAX reference of the same metric (sanity check)."""
    k = int(input_dim // 2)
    pos = jnp.reshape(x, (k, 2)).astype(jnp.float32)
    d = jnp.asarray(data, jnp.float32)
    dist2 = jnp.sum((d[:, None, :] - pos[None, :, :]) ** 2, axis=-1)
    idx = jnp.argmin(dist2, axis=1)
    counts = jnp.sum(jax.nn.one_hot(idx, k, dtype=jnp.float32), axis=0)
    return jnp.sqrt(jnp.mean((counts - jnp.mean(counts)) ** 2))


if __name__ == "__main__":
    key = jax.random.PRNGKey(0)
    kx, kd = jax.random.split(key)

    input_dim = 16                     # -> 8 facilities, each with (x, y)
    num_points = 1000                  # not a multiple of 128: exercises mask

    x = jax.random.uniform(kx, (input_dim,), dtype=jnp.float32)
    data = jax.random.uniform(kd, (num_points, 2), dtype=jnp.float32)

    result = placement_objective1(x, data, input_dim)
    result = jax.block_until_ready(result)

    ref = _reference(x, data, input_dim)
    assert result.shape == (1, 1)
    assert jnp.allclose(result[0, 0], ref, atol=1e-3), (result, ref)

    print("KERNEL_OK")
</pallas_src>

<mosaic_0001>
module attributes {stable_mosaic.version = 11 : i64} {
  func.func @_workload_counts_kernel(%arg0: i32, %arg1: i32, %arg2: memref<8x2xf32, #tpu.memory_space<vmem>>, %arg3: memref<2x1024xf32, #tpu.memory_space<vmem>>, %arg4: memref<1x8x1xf32, #tpu.memory_space<vmem>>, %arg5: memref<8x1xf32, #tpu.memory_space<vmem>>) attributes {dimension_semantics = [#tpu.dimension_semantics<parallel>, #tpu.dimension_semantics<arbitrary>], iteration_bounds = array<i64: 1, 1>, scalar_prefetch = 0 : i64, scratch_operands = 1 : i64, tpu.core_type = #tpu.core_type<tc>, window_params = [{pipeline_mode = #tpu.pipeline_mode<synchronous>, transform_indices = @transform_0, window_bounds = array<i64: 8, 2>}, {transform_indices = @transform_1, window_bounds = array<i64: 2, 1024>}, {transform_indices = @transform_2, window_bounds = array<i64: 1, 8, 1>}]} {
    %c1_i32 = arith.constant 1 : i32
    %0 = arith.muli %arg0, %c1_i32 : i32
    %1 = arith.addi %0, %arg1 : i32
    %c0_i32 = arith.constant 0 : i32
    %2 = arith.cmpi eq, %arg1, %c0_i32 : i32
    %3 = arith.extui %2 : i1 to i32
    %c0_i32_0 = arith.constant 0 : i32
    %4 = arith.cmpi ne, %3, %c0_i32_0 : i32
    scf.if %4 {
      %cst_13 = arith.constant 0.000000e+00 : f32
      %40 = vector.broadcast %cst_13 : f32 to vector<8x1xf32>
      %c0_14 = arith.constant 0 : index
      %c0_15 = arith.constant 0 : index
      %41 = vector.load %arg5[%c0_14, %c0_15] : memref<8x1xf32, #tpu.memory_space<vmem>>, vector<8x1xf32>
      tpu.vector_store %arg5[%c0_14, %c0_15], %40 {strides = array<i32>} : memref<8x1xf32, #tpu.memory_space<vmem>>, vector<8x1xf32>,
    } else {
    }
    %c0 = arith.constant 0 : index
    %c0_1 = arith.constant 0 : index
    %5 = vector.load %arg3[%c0, %c0_1] : memref<2x1024xf32, #tpu.memory_space<vmem>>, vector<1x1024xf32>
    %c1 = arith.constant 1 : index
    %c0_2 = arith.constant 0 : index
    %6 = vector.load %arg3[%c1, %c0_2] : memref<2x1024xf32, #tpu.memory_space<vmem>>, vector<1x1024xf32>
    %c0_3 = arith.constant 0 : index
    %c0_4 = arith.constant 0 : index
    %7 = vector.load %arg2[%c0_3, %c0_4] : memref<8x2xf32, #tpu.memory_space<vmem>>, vector<8x1xf32>
    %c0_5 = arith.constant 0 : index
    %c1_6 = arith.constant 1 : index
    %8 = vector.load %arg2[%c0_5, %c1_6] : memref<8x2xf32, #tpu.memory_space<vmem>>, vector<8x1xf32>
    %9 = vector.broadcast %5 : vector<1x1024xf32> to vector<8x1024xf32>
    %10 = vector.broadcast %7 : vector<8x1xf32> to vector<8x1024xf32>
    %11 = arith.subf %9, %10 : vector<8x1024xf32>
    %12 = vector.broadcast %6 : vector<1x1024xf32> to vector<8x1024xf32>
    %13 = vector.broadcast %8 : vector<8x1xf32> to vector<8x1024xf32>
    %14 = arith.subf %12, %13 : vector<8x1024xf32>
    %15 = arith.mulf %11, %11 : vector<8x1024xf32>
    %16 = arith.mulf %14, %14 : vector<8x1024xf32>
    %17 = arith.addf %15, %16 : vector<8x1024xf32>
    %cst = arith.constant dense<0x7F800000> : vector<1024xf32>
    %18 = vector.multi_reduction <minimumf>, %17, %cst [0] : vector<8x1024xf32> to vector<1024xf32>
    %19 = vector.shape_cast %18 : vector<1024xf32> to vector<1x1024xf32>
    %20 = tpu.iota {dimensions = array<i32: 0>} : vector<8x1024xi32>
    %21 = vector.broadcast %19 : vector<1x1024xf32> to vector<8x1024xf32>
    %22 = arith.cmpf ole, %17, %21 : vector<8x1024xf32>
    %c8_i32 = arith.constant 8 : i32
    %23 = vector.broadcast %c8_i32 : i32 to vector<8x1024xi32>
    %24 = arith.select %22, %20, %23 : vector<8x1024xi1>, vector<8x1024xi32>
    %cst_7 = arith.constant dense<2147483647> : vector<1024xi32>
    %25 = vector.multi_reduction <minsi>, %24, %cst_7 [0] : vector<8x1024xi32> to vector<1024xi32>
    %26 = vector.shape_cast %25 : vector<1024xi32> to vector<1x1024xi32>
    %27 = vector.broadcast %26 : vector<1x1024xi32> to vector<8x1024xi32>
    %28 = arith.cmpi eq, %20, %27 : vector<8x1024xi32>
    %c1_i32_8 = arith.constant 1 : i32
    %29 = arith.addi %1, %c1_i32_8 : i32
    %c1024_i32 = arith.constant 1024 : i32
    %30 = arith.muli %29, %c1024_i32 : i32
    %c1000_i32 = arith.constant 1000 : i32
    %31 = arith.cmpi sgt, %30, %c1000_i32 : i32
    %true = arith.constant true
    %32 = arith.xori %31, %true : i1
    %33 = arith.extui %32 : i1 to i32
    %c0_i32_9 = arith.constant 0 : i32
    %34 = arith.cmpi ne, %33, %c0_i32_9 : i32
    scf.if %34 {
      %40 = arith.extui %28 : vector<8x1024xi1> to vector<8x1024xi32>
      %41 = arith.sitofp %40 : vector<8x1024xi32> to vector<8x1024xf32>
      %c0_13 = arith.constant 0 : index
      %c0_14 = arith.constant 0 : index
      %42 = vector.load %arg5[%c0_13, %c0_14] : memref<8x1xf32, #tpu.memory_space<vmem>>, vector<8x1xf32>
      %cst_15 = arith.constant dense<0.000000e+00> : vector<8xf32>
      %43 = vector.multi_reduction <add>, %41, %cst_15 [1] : vector<8x1024xf32> to vector<8xf32>
      %44 = vector.shape_cast %43 : vector<8xf32> to vector<8x1xf32>
      %45 = arith.addf %42, %44 : vector<8x1xf32>
      %c0_16 = arith.constant 0 : index
      %c0_17 = arith.constant 0 : index
      %46 = vector.load %arg5[%c0_16, %c0_17] : memref<8x1xf32, #tpu.memory_space<vmem>>, vector<8x1xf32>
      tpu.vector_store %arg5[%c0_16, %c0_17], %45 {strides = array<i32>} : memref<8x1xf32, #tpu.memory_space<vmem>>, vector<8x1xf32>,
    } else {
    }
    %35 = arith.extui %31 : i1 to i32
    %c0_i32_10 = arith.constant 0 : i32
    %36 = arith.cmpi ne, %35, %c0_i32_10 : i32
    scf.if %36 {
      %c1024_i32_13 = arith.constant 1024 : i32
      %40 = arith.muli %1, %c1024_i32_13 : i32
      %41 = tpu.iota {dimensions = array<i32: 1>} : vector<1x1024xi32>
      %42 = vector.broadcast %40 : i32 to vector<1x1024xi32>
      %43 = arith.addi %42, %41 : vector<1x1024xi32>
      %c1000_i32_14 = arith.constant 1000 : i32
      %44 = vector.broadcast %c1000_i32_14 : i32 to vector<1x1024xi32>
      %45 = arith.cmpi slt, %43, %44 : vector<1x1024xi32>
      %46 = arith.extui %45 : vector<1x1024xi1> to vector<1x1024xi32>
      %47 = arith.sitofp %46 : vector<1x1024xi32> to vector<1x1024xf32>
      %cst_15 = arith.constant 0.000000e+00 : f32
      %48 = vector.shape_cast %47 : vector<1x1024xf32> to vector<1x1024xf32>
      %49 = vector.broadcast %48 : vector<1x1024xf32> to vector<8x1024xf32>
      %50 = vector.broadcast %cst_15 : f32 to vector<8x1024xf32>
      %51 = arith.select %28, %49, %50 : vector<8x1024xi1>, vector<8x1024xf32>
      %c0_16 = arith.constant 0 : index
      %c0_17 = arith.constant 0 : index
      %52 = vector.load %arg5[%c0_16, %c0_17] : memref<8x1xf32, #tpu.memory_space<vmem>>, vector<8x1xf32>
      %cst_18 = arith.constant dense<0.000000e+00> : vector<8xf32>
      %53 = vector.multi_reduction <add>, %51, %cst_18 [1] : vector<8x1024xf32> to vector<8xf32>
      %54 = vector.shape_cast %53 : vector<8xf32> to vector<8x1xf32>
      %55 = arith.addf %52, %54 : vector<8x1xf32>
      %c0_19 = arith.constant 0 : index
      %c0_20 = arith.constant 0 : index
      %56 = vector.load %arg5[%c0_19, %c0_20] : memref<8x1xf32, #tpu.memory_space<vmem>>, vector<8x1xf32>
      tpu.vector_store %arg5[%c0_19, %c0_20], %55 {strides = array<i32>} : memref<8x1xf32, #tpu.memory_space<vmem>>, vector<8x1xf32>,
    } else {
    }
    %c0_i32_11 = arith.constant 0 : i32
    %37 = arith.cmpi eq, %arg1, %c0_i32_11 : i32
    %38 = arith.extui %37 : i1 to i32
    %c0_i32_12 = arith.constant 0 : i32
    %39 = arith.cmpi ne, %38, %c0_i32_12 : i32
    scf.if %39 {
      %c0_13 = arith.constant 0 : index
      %c0_14 = arith.constant 0 : index
      %40 = vector.load %arg5[%c0_13, %c0_14] : memref<8x1xf32, #tpu.memory_space<vmem>>, vector<8x1xf32>
      %c0_15 = arith.constant 0 : index
      %c0_16 = arith.constant 0 : index
      %c0_17 = arith.constant 0 : index
      %41 = vector.load %arg4[%c0_15, %c0_16, %c0_17] : memref<1x8x1xf32, #tpu.memory_space<vmem>>, vector<1x8x1xf32>
      %42 = vector.shape_cast %41 : vector<1x8x1xf32> to vector<8x1xf32>
      %43 = vector.shape_cast %40 : vector<8x1xf32> to vector<1x8x1xf32>
      tpu.vector_store %arg4[%c0_15, %c0_16, %c0_17], %43 {strides = array<i32>} : memref<1x8x1xf32, #tpu.memory_space<vmem>>, vector<1x8x1xf32>,
    } else {
    }
    return
  }
  func.func @transform_0(%arg0: i32, %arg1: i32) -> (i32, i32) {
    %c0_i32 = arith.constant 0 : i32
    %c0_i32_0 = arith.constant 0 : i32
    %c0_i32_1 = arith.constant 0 : i32
    return %c0_i32, %c0_i32_0 : i32, i32
  }
  func.func @transform_1(%arg0: i32, %arg1: i32) -> (i32, i32) {
    %c1_i32 = arith.constant 1 : i32
    %0 = arith.muli %arg0, %c1_i32 : i32
    %1 = arith.addi %0, %arg1 : i32
    %c0_i32 = arith.constant 0 : i32
    %c0_i32_0 = arith.constant 0 : i32
    return %c0_i32, %1 : i32, i32
  }
  func.func @transform_2(%arg0: i32, %arg1: i32) -> (i32, i32, i32) {
    %c0_i32 = arith.constant 0 : i32
    %c0_i32_0 = arith.constant 0 : i32
    %c0_i32_1 = arith.constant 0 : i32
    return %arg0, %c0_i32, %c0_i32_0 : i32, i32, i32
  }
}

</mosaic_0001>

<llo_original>
// kernel: tpu_custom_call.1
$region0: #{tpu_custom_call.1}
  #allocation0 [shape = 'u32[]', space=smem, size = 0x4, offset = 0x4, fixed_abs, tag = 'smem constant byte address 0x4 - core index']
  #allocation1 [shape = 'u32[144,128]{1,0:T(1,128)}', space=vmem, size = 0x12000, scoped, tag = 'internal scratch']
  #allocation2 [shape = 'f32[8,1]{1,0:T(8,128)}', space=vmem, size = 0x1000, scoped, tag = 'scratch operand']
  %s0 = inlined_call_operand.vmem [shape: f32[8,2], index: 0, kind: input, shape index: {}]
  %s1 = inlined_call_operand.hbm [shape: f32[2,1024], index: 1, kind: input, shape index: {}]
  %s2 = inlined_call_operand.vmem [shape: f32[1,8,1], index: 2, kind: output, shape index: {}]
  %s3 = sld [smem:[#allocation0]]
  $region38: #{tpu_custom_call.1} parent=0
    _
  %s5 = ssub.s32 1, %s3
  %s6 = scalar_select 0, %s5, %s3
  $region1: #{tpu_custom_call.1} parent=0
    #allocation3 [shape = 'u8[8192]{0}', space=vmem, size = 0x2000, scoped, tag = 'input window, operand 1, single buffered']
    #allocation4 [shape = 's32[1]{0}', space=sflag, size = 0x4, scoped, tag = 'scoped memory for tpu_custom_call.1']
    %7 = vsyncpa [#allocation4], 0
    // Predicated region
    $region2: #{tpu_custom_call.1} parent=1 // pred_check
      _
    $region3: #{tpu_custom_call.1} parent=1 // pred_check_branch
      %9 = sbr.rel (0) target = $region5
    $region4: #{tpu_custom_call.1} parent=1 // pred_region
      _
    $region5: #{tpu_custom_call.1} parent=1 // pred_fallthru
      _
    // Predicated region
    $region6: #{tpu_custom_call.1} parent=1 // pred_check
      _
    $region7: #{tpu_custom_call.1} parent=1 // pred_check_branch
      %11 = sbr.rel (0) target = $region9
    $region8: #{tpu_custom_call.1} parent=1 // pred_region
      %s12 = sadd.s32 0, 0
      %s13 = smul.u32 8, %s12
      %s15 = ssub.s32 256, 256
      %16 = vsyncadd [#allocation4], %s15
      %s17 = smul.addr %s13, 32
      %s18 = scalar_lea.hbm %s1, %s17
      %s20 = sshll.u32 [#allocation3], 4
      %s21 = int_to_ptr.vmem [resolvable:$true] %s20
      %23 = dma.hbm_to_vmem [thread:$0]  %s18, 256, %s21, [#allocation4]
    $region9: #{tpu_custom_call.1} parent=1 // pred_fallthru
      _
    // Predicated region
    $region10: #{tpu_custom_call.1} parent=1 // pred_check
      _
    $region11: #{tpu_custom_call.1} parent=1 // pred_check_branch
      %25 = sbr.rel (0) target = $region13
    $region12: #{tpu_custom_call.1} parent=1 // pred_region
      %26 = dma.done [#allocation4], 256
    $region13: #{tpu_custom_call.1} parent=1 // pred_fallthru
      _
    %s27 = sadd.s32 0, 0
    %s28 = smul.u32 8, %s27
    %s29 = sadd.s32 0, 0
    %p30 = scmp.eq.s32.totalorder 0, 0
    // Predicated region
    $region14: #{tpu_custom_call.1} parent=1 // pred_check
      %p31 = pneg %p30
    $region15: #{tpu_custom_call.1} parent=1 // pred_check_branch
      %33 = sbr.rel (%p31) target = $region17
    $region16: #{tpu_custom_call.1} parent=1 // pred_region
      %vm34 = vcmask 7168
      %35 = vst.msk [vmem:[#allocation2] sm:$0xff] %vm34, 0.0
    $region17: #{tpu_custom_call.1} parent=1 // pred_fallthru
      _
    %v36 = vld [vmem:[#allocation3] ss:$2 sm:$0xff]
    %s37 = scalar_lea.vmem [#allocation3], 1
    %v38 = vld [vmem:[%s37] ss:$2 sm:$0xff]
    %v39 = vld [vmem:[%s0] sm:$0xff]
    %v41 = vlaneseq
    %v42 = vshrl.u32 %v41, 7
    %v43 = vsub.s32 0, %v42
    %v44 = vrot.slane %v36, %v43
    %v45 = vlaneseq
    %v46 = vshrl.u32 %v45, 7
    %v47 = vsub.s32 1, %v46
    %v48 = vrot.slane %v36, %v47
    %v49 = vlaneseq
    %v50 = vshrl.u32 %v49, 7
    %v51 = vsub.s32 2, %v50
    %v52 = vrot.slane %v36, %v51
    %v53 = vlaneseq
    %v54 = vshrl.u32 %v53, 7
    %v55 = vsub.s32 3, %v54
    %v56 = vrot.slane %v36, %v55
    %v57 = vlaneseq
    %v58 = vshrl.u32 %v57, 7
    %v59 = vsub.s32 4, %v58
    %v60 = vrot.slane %v36, %v59
    %v61 = vlaneseq
    %v62 = vshrl.u32 %v61, 7
    %v63 = vsub.s32 5, %v62
    %v64 = vrot.slane %v36, %v63
    %v65 = vlaneseq
    %v66 = vshrl.u32 %v65, 7
    %v67 = vsub.s32 6, %v66
    %v68 = vrot.slane %v36, %v67
    %v69 = vlaneseq
    %v70 = vshrl.u32 %v69, 7
    %v71 = vsub.s32 7, %v70
    %v72 = vrot.slane %v36, %v71
    %82 = vset.pattern.permute.xlu0 0
    %83 = vperm.xlu0 %82, %v39
    %v84 = vpop.permute.xlu0 %83
    %v86 = vsub.f32 %v44, %v84
    %v87 = vsub.f32 %v48, %v84
    %v88 = vsub.f32 %v52, %v84
    %v89 = vsub.f32 %v56, %v84
    %v90 = vsub.f32 %v60, %v84
    %v91 = vsub.f32 %v64, %v84
    %v92 = vsub.f32 %v68, %v84
    %v93 = vsub.f32 %v72, %v84
    %v95 = vlaneseq
    %v96 = vshrl.u32 %v95, 7
    %v97 = vsub.s32 0, %v96
    %v98 = vrot.slane %v38, %v97
    %v99 = vlaneseq
    %v100 = vshrl.u32 %v99, 7
    %v101 = vsub.s32 1, %v100
    %v102 = vrot.slane %v38, %v101
    %v103 = vlaneseq
    %v104 = vshrl.u32 %v103, 7
    %v105 = vsub.s32 2, %v104
    %v106 = vrot.slane %v38, %v105
    %v107 = vlaneseq
    %v108 = vshrl.u32 %v107, 7
    %v109 = vsub.s32 3, %v108
    %v110 = vrot.slane %v38, %v109
    %v111 = vlaneseq
    %v112 = vshrl.u32 %v111, 7
    %v113 = vsub.s32 4, %v112
    %v114 = vrot.slane %v38, %v113
    %v115 = vlaneseq
    %v116 = vshrl.u32 %v115, 7
    %v117 = vsub.s32 5, %v116
    %v118 = vrot.slane %v38, %v117
    %v119 = vlaneseq
    %v120 = vshrl.u32 %v119, 7
    %v121 = vsub.s32 6, %v120
    %v122 = vrot.slane %v38, %v121
    %v123 = vlaneseq
    %v124 = vshrl.u32 %v123, 7
    %v125 = vsub.s32 7, %v124
    %v126 = vrot.slane %v38, %v125
    %135 = vset.pattern.permute.xlu0 1
    %136 = vperm.xlu0 %135, %v39
    %v137 = vpop.permute.xlu0 %136
    %v139 = vsub.f32 %v98, %v137
    %v140 = vsub.f32 %v102, %v137
    %v141 = vsub.f32 %v106, %v137
    %v142 = vsub.f32 %v110, %v137
    %v143 = vsub.f32 %v114, %v137
    %v144 = vsub.f32 %v118, %v137
    %v145 = vsub.f32 %v122, %v137
    %v146 = vsub.f32 %v126, %v137
    %v147 = vmul.f32 %v86, %v86
    %v148 = vmul.f32 %v87, %v87
    %v149 = vmul.f32 %v88, %v88
    %v150 = vmul.f32 %v89, %v89
    %v151 = vmul.f32 %v90, %v90
    %v152 = vmul.f32 %v91, %v91
    %v153 = vmul.f32 %v92, %v92
    %v154 = vmul.f32 %v93, %v93
    %v155 = vmul.f32 %v139, %v139
    %v156 = vmul.f32 %v140, %v140
    %v157 = vmul.f32 %v141, %v141
    %v158 = vmul.f32 %v142, %v142
    %v159 = vmul.f32 %v143, %v143
    %v160 = vmul.f32 %v144, %v144
    %v161 = vmul.f32 %v145, %v145
    %v162 = vmul.f32 %v146, %v146
    %v163 = vadd.f32 %v147, %v155
    %v164 = vadd.f32 %v148, %v156
    %v165 = vadd.f32 %v149, %v157
    %v166 = vadd.f32 %v150, %v158
    %v167 = vadd.f32 %v151, %v159
    %v168 = vadd.f32 %v152, %v160
    %v169 = vadd.f32 %v153, %v161
    %v170 = vadd.f32 %v154, %v162
    %v171 = vrot.slane %v163, 4
    %v172 = vmin.f32 %v163, %v171
    %v173 = vrot.slane %v172, 2
    %v174 = vmin.f32 %v172, %v173
    %v175 = vrot.slane %v174, 1
    %v176 = vmin.f32 %v174, %v175
    %v177 = vrot.slane %v164, 4
    %v178 = vmin.f32 %v164, %v177
    %v179 = vrot.slane %v178, 2
    %v180 = vmin.f32 %v178, %v179
    %v181 = vrot.slane %v180, 1
    %v182 = vmin.f32 %v180, %v181
    %v183 = vrot.slane %v165, 4
    %v184 = vmin.f32 %v165, %v183
    %v185 = vrot.slane %v184, 2
    %v186 = vmin.f32 %v184, %v185
    %v187 = vrot.slane %v186, 1
    %v188 = vmin.f32 %v186, %v187
    %v189 = vrot.slane %v166, 4
    %v190 = vmin.f32 %v166, %v189
    %v191 = vrot.slane %v190, 2
    %v192 = vmin.f32 %v190, %v191
    %v193 = vrot.slane %v192, 1
    %v194 = vmin.f32 %v192, %v193
    %v195 = vrot.slane %v167, 4
    %v196 = vmin.f32 %v167, %v195
    %v197 = vrot.slane %v196, 2
    %v198 = vmin.f32 %v196, %v197
    %v199 = vrot.slane %v198, 1
    %v200 = vmin.f32 %v198, %v199
    %v201 = vrot.slane %v168, 4
    %v202 = vmin.f32 %v168, %v201
    %v203 = vrot.slane %v202, 2
    %v204 = vmin.f32 %v202, %v203
    %v205 = vrot.slane %v204, 1
    %v206 = vmin.f32 %v204, %v205
    %v207 = vrot.slane %v169, 4
    %v208 = vmin.f32 %v169, %v207
    %v209 = vrot.slane %v208, 2
    %v210 = vmin.f32 %v208, %v209
    %v211 = vrot.slane %v210, 1
    %v212 = vmin.f32 %v210, %v211
    %v213 = vrot.slane %v170, 4
    %v214 = vmin.f32 %v170, %v213
    %v215 = vrot.slane %v214, 2
    %v216 = vmin.f32 %v214, %v215
    %v217 = vrot.slane %v216, 1
    %v218 = vmin.f32 %v216, %v217
    %v219 = vlaneseq
    %v220 = vshrl.u32 %v219, 7
    %vm221 = vcmp.le.f32.partialorder %v163, %v176
    %vm222 = vcmp.le.f32.partialorder %v164, %v182
    %vm223 = vcmp.le.f32.partialorder %v165, %v188
    %vm224 = vcmp.le.f32.partialorder %v166, %v194
    %vm225 = vcmp.le.f32.partialorder %v167, %v200
    %vm226 = vcmp.le.f32.partialorder %v168, %v206
    %vm227 = vcmp.le.f32.partialorder %v169, %v212
    %vm228 = vcmp.le.f32.partialorder %v170, %v218
    %v229 = vsel %vm221, %v220, 8
    %v230 = vsel %vm222, %v220, 8
    %v231 = vsel %vm223, %v220, 8
    %v232 = vsel %vm224, %v220, 8
    %v233 = vsel %vm225, %v220, 8
    %v234 = vsel %vm226, %v220, 8
    %v235 = vsel %vm227, %v220, 8
    %v236 = vsel %vm228, %v220, 8
    %v237 = vrot.slane %v229, 4
    %vm238 = vcmp.lt.s32.totalorder %v229, %v237
    %v239 = vsel %vm238, %v229, %v237
    %v240 = vrot.slane %v239, 2
    %vm241 = vcmp.lt.s32.totalorder %v239, %v240
    %v242 = vsel %vm241, %v239, %v240
    %v243 = vrot.slane %v242, 1
    %vm244 = vcmp.lt.s32.totalorder %v242, %v243
    %v245 = vsel %vm244, %v242, %v243
    %v246 = vrot.slane %v230, 4
    %vm247 = vcmp.lt.s32.totalorder %v230, %v246
    %v248 = vsel %vm247, %v230, %v246
    %v249 = vrot.slane %v248, 2
    %vm250 = vcmp.lt.s32.totalorder %v248, %v249
    %v251 = vsel %vm250, %v248, %v249
    %v252 = vrot.slane %v251, 1
    %vm253 = vcmp.lt.s32.totalorder %v251, %v252
    %v254 = vsel %vm253, %v251, %v252
    %v255 = vrot.slane %v231, 4
    %vm256 = vcmp.lt.s32.totalorder %v231, %v255
    %v257 = vsel %vm256, %v231, %v255
    %v258 = vrot.slane %v257, 2
    %vm259 = vcmp.lt.s32.totalorder %v257, %v258
    %v260 = vsel %vm259, %v257, %v258
    %v261 = vrot.slane %v260, 1
    %vm262 = vcmp.lt.s32.totalorder %v260, %v261
    %v263 = vsel %vm262, %v260, %v261
    %v264 = vrot.slane %v232, 4
    %vm265 = vcmp.lt.s32.totalorder %v232, %v264
    %v266 = vsel %vm265, %v232, %v264
    %v267 = vrot.slane %v266, 2
    %vm268 = vcmp.lt.s32.totalorder %v266, %v267
    %v269 = vsel %vm268, %v266, %v267
    %v270 = vrot.slane %v269, 1
    %vm271 = vcmp.lt.s32.totalorder %v269, %v270
    %v272 = vsel %vm271, %v269, %v270
    %v273 = vrot.slane %v233, 4
    %vm274 = vcmp.lt.s32.totalorder %v233, %v273
    %v275 = vsel %vm274, %v233, %v273
    %v276 = vrot.slane %v275, 2
    %vm277 = vcmp.lt.s32.totalorder %v275, %v276
    %v278 = vsel %vm277, %v275, %v276
    %v279 = vrot.slane %v278, 1
    %vm280 = vcmp.lt.s32.totalorder %v278, %v279
    %v281 = vsel %vm280, %v278, %v279
    %v282 = vrot.slane %v234, 4
    %vm283 = vcmp.lt.s32.totalorder %v234, %v282
    %v284 = vsel %vm283, %v234, %v282
    %v285 = vrot.slane %v284, 2
    %vm286 = vcmp.lt.s32.totalorder %v284, %v285
    %v287 = vsel %vm286, %v284, %v285
    %v288 = vrot.slane %v287, 1
    %vm289 = vcmp.lt.s32.totalorder %v287, %v288
    %v290 = vsel %vm289, %v287, %v288
    %v291 = vrot.slane %v235, 4
    %vm292 = vcmp.lt.s32.totalorder %v235, %v291
    %v293 = vsel %vm292, %v235, %v291
    %v294 = vrot.slane %v293, 2
    %vm295 = vcmp.lt.s32.totalorder %v293, %v294
    %v296 = vsel %vm295, %v293, %v294
    %v297 = vrot.slane %v296, 1
    %vm298 = vcmp.lt.s32.totalorder %v296, %v297
    %v299 = vsel %vm298, %v296, %v297
    %v300 = vrot.slane %v236, 4
    %vm301 = vcmp.lt.s32.totalorder %v236, %v300
    %v302 = vsel %vm301, %v236, %v300
    %v303 = vrot.slane %v302, 2
    %vm304 = vcmp.lt.s32.totalorder %v302, %v303
    %v305 = vsel %vm304, %v302, %v303
    %v306 = vrot.slane %v305, 1
    %vm307 = vcmp.lt.s32.totalorder %v305, %v306
    %v308 = vsel %vm307, %v305, %v306
    %vm309 = vcmp.eq.s32.totalorder %v220, %v245
    %vm310 = vcmp.eq.s32.totalorder %v220, %v254
    %vm311 = vcmp.eq.s32.totalorder %v220, %v263
    %vm312 = vcmp.eq.s32.totalorder %v220, %v272
    %vm313 = vcmp.eq.s32.totalorder %v220, %v281
    %vm314 = vcmp.eq.s32.totalorder %v220, %v290
    %vm315 = vcmp.eq.s32.totalorder %v220, %v299
    %vm316 = vcmp.eq.s32.totalorder %v220, %v308
    %s317 = sadd.s32 %s29, 1
    %s318 = smul.u32 %s317, 1024
    %p319 = scmp.gt.s32.totalorder %s318, 1000
    %p320 = scmp.le.s32.totalorder %s318, 1000
    // Predicated region
    $region18: #{tpu_custom_call.1} parent=1 // pred_check
      %p321 = pneg %p320
    $region19: #{tpu_custom_call.1} parent=1 // pred_check_branch
      %323 = sbr.rel (%p321) target = $region21
    $region20: #{tpu_custom_call.1} parent=1 // pred_region
      %v324 = vsel %vm309, 1, 0
      %v325 = vsel %vm310, 1, 0
      %v326 = vsel %vm311, 1, 0
      %v327 = vsel %vm312, 1, 0
      %v328 = vsel %vm313, 1, 0
      %v329 = vsel %vm314, 1, 0
      %v330 = vsel %vm315, 1, 0
      %v331 = vsel %vm316, 1, 0
      %v332 = vcvt.s32.f32 %v324
      %v333 = vcvt.s32.f32 %v325
      %v334 = vcvt.s32.f32 %v326
      %v335 = vcvt.s32.f32 %v327
      %v336 = vcvt.s32.f32 %v328
      %v337 = vcvt.s32.f32 %v329
      %v338 = vcvt.s32.f32 %v330
      %v339 = vcvt.s32.f32 %v331
      %v340 = vld [vmem:[#allocation2] sm:$0xff]
      %v341 = vadd.f32 %v332, %v333
      %v342 = vadd.f32 %v341, %v334
      %v343 = vadd.f32 %v342, %v335
      %v344 = vadd.f32 %v343, %v336
      %v345 = vadd.f32 %v344, %v337
      %v346 = vadd.f32 %v345, %v338
      %v347 = vadd.f32 %v346, %v339
      %348 = vadd.xlane.f32.xlu0 %v347
      %v349 = vpop.xlane.xlu0 %348
      %v350 = vadd.f32 %v340, %v349
      %vm351 = vcmask 7168
      %352 = vst.msk [vmem:[#allocation2] sm:$0xff] %vm351, %v350
    $region21: #{tpu_custom_call.1} parent=1 // pred_fallthru
      _
    // Predicated region
    $region22: #{tpu_custom_call.1} parent=1 // pred_check
      %p353 = pneg %p319
    $region23: #{tpu_custom_call.1} parent=1 // pred_check_branch
      %355 = sbr.rel (%p353) target = $region25
    $region24: #{tpu_custom_call.1} parent=1 // pred_region
      %s356 = smul.u32 %s29, 1024
      %v357 = vlaneseq
      %v358 = vand.u32 %v357, 127
      %v359 = vadd.s32 %v358, 128
      %v360 = vadd.s32 %v358, 256
      %v361 = vadd.s32 %v358, 384
      %v362 = vadd.s32 %v358, 512
      %v363 = vadd.s32 %v358, 640
      %v364 = vadd.s32 %v358, 768
      %v365 = vadd.s32 %v358, 896
      %v366 = vstv %s356
      %v367 = vadd.s32 %v366, %v358
      %v368 = vadd.s32 %v366, %v359
      %v369 = vadd.s32 %v366, %v360
      %v370 = vadd.s32 %v366, %v361
      %v371 = vadd.s32 %v366, %v362
      %v372 = vadd.s32 %v366, %v363
      %v373 = vadd.s32 %v366, %v364
      %v374 = vadd.s32 %v366, %v365
      %vm375 = vcmp.lt.s32.totalorder %v367, 1000
      %vm376 = vcmp.lt.s32.totalorder %v368, 1000
      %vm377 = vcmp.lt.s32.totalorder %v369, 1000
      %vm378 = vcmp.lt.s32.totalorder %v370, 1000
      %vm379 = vcmp.lt.s32.totalorder %v371, 1000
      %vm380 = vcmp.lt.s32.totalorder %v372, 1000
      %vm381 = vcmp.lt.s32.totalorder %v373, 1000
      %vm382 = vcmp.lt.s32.totalorder %v374, 1000
      %v383 = vsel %vm375, 1, 0
      %v384 = vsel %vm376, 1, 0
      %v385 = vsel %vm377, 1, 0
      %v386 = vsel %vm378, 1, 0
      %v387 = vsel %vm379, 1, 0
      %v388 = vsel %vm380, 1, 0
      %v389 = vsel %vm381, 1, 0
      %v390 = vsel %vm382, 1, 0
      %v391 = vcvt.s32.f32 %v383
      %v392 = vcvt.s32.f32 %v384
      %v393 = vcvt.s32.f32 %v385
      %v394 = vcvt.s32.f32 %v386
      %v395 = vcvt.s32.f32 %v387
      %v396 = vcvt.s32.f32 %v388
      %v397 = vcvt.s32.f32 %v389
      %v398 = vcvt.s32.f32 %v390
      %v399 = vsel %vm309, %v391, 0.0
      %v400 = vsel %vm310, %v392, 0.0
      %v401 = vsel %vm311, %v393, 0.0
      %v402 = vsel %vm312, %v394, 0.0
      %v403 = vsel %vm313, %v395, 0.0
      %v404 = vsel %vm314, %v396, 0.0
      %v405 = vsel %vm315, %v397, 0.0
      %v406 = vsel %vm316, %v398, 0.0
      %v407 = vld [vmem:[#allocation2] sm:$0xff]
      %v408 = vadd.f32 %v399, %v400
      %v409 = vadd.f32 %v408, %v401
      %v410 = vadd.f32 %v409, %v402
      %v411 = vadd.f32 %v410, %v403
      %v412 = vadd.f32 %v411, %v404
      %v413 = vadd.f32 %v412, %v405
      %v414 = vadd.f32 %v413, %v406
      %415 = vadd.xlane.f32.xlu0 %v414
      %v416 = vpop.xlane.xlu0 %415
      %v417 = vadd.f32 %v407, %v416
      %vm418 = vcmask 7168
      %419 = vst.msk [vmem:[#allocation2] sm:$0xff] %vm418, %v417
    $region25: #{tpu_custom_call.1} parent=1 // pred_fallthru
      _
    // Predicated region
    $region26: #{tpu_custom_call.1} parent=1 // pred_check
      %p420 = pneg %p30
    $region27: #{tpu_custom_call.1} parent=1 // pred_check_branch
      %422 = sbr.rel (%p420) target = $region29
    $region28: #{tpu_custom_call.1} parent=1 // pred_region
      %v423 = vld [vmem:[#allocation2] sm:$0xff]
      %vm424 = vcmask 7168
      %425 = vst.msk [vmem:[%s2] sm:$0xff] %vm424, %v423
    $region29: #{tpu_custom_call.1} parent=1 // pred_fallthru
      _
    // Predicated region
    $region30: #{tpu_custom_call.1} parent=1 // pred_check
      _
    $region31: #{tpu_custom_call.1} parent=1 // pred_check_branch
      %427 = sbr.rel (0) target = $region33
    $region32: #{tpu_custom_call.1} parent=1 // pred_region
      _
    $region33: #{tpu_custom_call.1} parent=1 // pred_fallthru
      _
    // Predicated region
    $region34: #{tpu_custom_call.1} parent=1 // pred_check
      _
    $region35: #{tpu_custom_call.1} parent=1 // pred_check_branch
      %429 = sbr.rel (0) target = $region37
    $region36: #{tpu_custom_call.1} parent=1 // pred_region
      _
    $region37: #{tpu_custom_call.1} parent=1 // pred_fallthru
      _
    %430 = vsyncpa [#allocation4], 1

</llo_original>
